<compile_context>
chip_gen: v5e
topology: v5e:2x2
jax: 0.10.0
libtpu: 0.0.40
codegen_flags: <defaults>
</compile_context>

<pallas_src>
import numpy as np
import jax
import jax.numpy as jnp
from jax.experimental import pallas as pl
from jax.experimental.pallas import tpu as pltpu

_PAD_C = 128                       # lane-dense output width
_VMEM_LIMIT = 48 * 1024 * 1024     # leave headroom on v7x (64 MiB physical)


# -----------------------------------------------------------------------------
# Kernel 1: tiled GCN aggregation  h = relu(A_hat @ XW + b1),  XW precomputed
# -----------------------------------------------------------------------------
def gcn_kernel(xw_ref, a_ref, b1_ref, h_ref, acc_ref):
    k = pl.program_id(1)

    @pl.when(k == 0)
    def _():
        acc_ref[...] = jnp.zeros_like(acc_ref)

    acc_ref[...] += jnp.dot(a_ref[...], xw_ref[...],
                            preferred_element_type=jnp.float32)

    @pl.when(k == pl.num_programs(1) - 1)
    def _():
        h_ref[...] = jnp.maximum(acc_ref[...] + b1_ref[...], 0.0)


# -----------------------------------------------------------------------------
# Kernel 2: streamed pooling / attention / mixture / classifier head
# -----------------------------------------------------------------------------
def head_kernel(h_ref, maskT_ref, xroot_ref,
                gw1f_ref, gb1f_ref, gw2t_ref,
                nw1_ref, nb1_ref, nw2_ref, nb2_ref,
                l3wn_ref, l3wg_ref, l3b_ref,
                l0w_ref, l0b_ref,
                l1wn_ref, l1wh_ref, l1b_ref,
                l2w_ref, l2b_ref,
                out_ref,
                hmax_acc, m_acc, s_acc, wsum_acc):
    f32 = jnp.float32
    BIG = jnp.float32(1e30)
    step = pl.program_id(0)
    last = pl.num_programs(0) - 1

    @pl.when(step == 0)
    def _():
        hmax_acc[...] = jnp.full_like(hmax_acc, -BIG)
        m_acc[...] = jnp.full_like(m_acc, -jnp.inf)
        s_acc[...] = jnp.zeros_like(s_acc)
        wsum_acc[...] = jnp.zeros_like(wsum_acc)

    h = h_ref[...]                               # [tn, H]
    maskT = maskT_ref[...]                       # [tn, B]
    madd = (maskT - 1.0) * BIG                   # additive mask: 0 / -1e30
    B = maskT.shape[1]

    # --- global_max_pool: running per-graph masked max (static B loop; no
    #     [tn, B, H] broadcast materialized) ----------------------------------
    tile_max = jnp.concatenate(
        [jnp.max(h + madd[:, b:b + 1], axis=0, keepdims=True) for b in range(B)],
        axis=0)                                  # [B, H]
    hmax_acc[...] = jnp.maximum(hmax_acc[...], tile_max)

    # --- gate_nn & nn first layers: two separate dots (no intra-vreg slice) --
    # (eval-mode BatchNorm already folded into gw1f/gb1f on host)
    g = jnp.maximum(jnp.dot(h, gw1f_ref[...], preferred_element_type=f32)
                    + gb1f_ref[...], 0.0)        # [tn, 2H]
    n1 = jnp.maximum(jnp.dot(h, nw1_ref[...], preferred_element_type=f32)
                     + nb1_ref[...], 0.0)        # [tn, H]

    # gate: 1-lane output -> VPU multiply + lane reduce (no 1-lane MXU op).
    # The gate bias is dropped: the per-graph softmax is shift invariant.
    gate = jnp.sum(g * gw2t_ref[...], axis=-1, keepdims=True)               # [tn, 1]
    nnh = jnp.dot(n1, nw2_ref[...], preferred_element_type=f32) + nb2_ref[...]  # [tn, H]

    # --- online (streaming) per-graph softmax over gate scores ---------------
    gate_nb = gate + madd                        # [tn, B]
    m_old = m_acc[...]                           # [1, B]
    m_new = jnp.maximum(m_old, jnp.max(gate_nb, axis=0, keepdims=True))
    corr = jnp.exp(m_old - m_new)                # [1, B]
    p = jnp.exp(gate_nb - m_new)                 # [tn, B], masked rows -> 0
    s_acc[...] = corr * s_acc[...] + jnp.sum(p, axis=0, keepdims=True)
    # weighted sum kept lane-major (H, B) so "corr" broadcasts along sublanes.
    contrib_hb = jax.lax.dot_general(nnh, p, (((0,), (0,)), ((), ())),
                                     preferred_element_type=f32)            # [H, B]
    wsum_acc[...] = corr * wsum_acc[...] + contrib_hb
    m_acc[...] = m_new

    # --- final: mixture 'type3' + concat branch + classifier (last tile only)
    @pl.when(step == last)
    def _():
        h_node = hmax_acc[...]                                              # [B, H]
        # empty-graph guard: reference would produce NaN; we return finite junk.
        inv_s = 1.0 / jnp.maximum(s_acc[...], 1e-30)                        # [1, B]
        hg_hb = wsum_acc[...] * inv_s                                       # [H, B]
        # h_graph @ l3wg without transposing: contract the H axis of both.
        hh = (jnp.dot(h_node, l3wn_ref[...], preferred_element_type=f32)
              + jax.lax.dot_general(hg_hb, l3wg_ref[...],
                                    (((0,), (0,)), ((), ())),
                                    preferred_element_type=f32)
              + l3b_ref[...])                                               # [B, H]
        news = jnp.maximum(
            jnp.dot(xroot_ref[...], l0w_ref[...], preferred_element_type=f32)
            + l0b_ref[...], 0.0)                                            # [B, H]
        h2 = jnp.maximum(
            jnp.dot(news, l1wn_ref[...], preferred_element_type=f32)
            + jnp.dot(hh, l1wh_ref[...], preferred_element_type=f32)
            + l1b_ref[...], 0.0)                                            # [B, H]
        # lin2 + log_softmax over a 128-lane padded slab: pad weights are 0 and
        # pad bias is -1e30, so pads never win the max and add exp(.)=0.
        logits = jnp.dot(h2, l2w_ref[...], preferred_element_type=f32) + l2b_ref[...]
        mx = jnp.max(logits, axis=-1, keepdims=True)
        z = logits - mx
        lse = jnp.log(jnp.sum(jnp.exp(z), axis=-1, keepdims=True))
        out_ref[...] = z - lse


# -----------------------------------------------------------------------------
# Wrapper
# -----------------------------------------------------------------------------
def _pick_tile(n, pref=512):
    # 512 is a multiple of both 128 (v5e MXU) and 256 (v6e/v7x MXU) and sits
    # near the HBM-roofline knee for mem-bound streaming of A_hat.
    if n <= pref:
        return n
    for t in (pref, 256, 128, 64, 32, 16, 8):
        if n % t == 0:
            return t
    return n


def net_forward(x, a_hat, maskT, root, p, agg_dtype=jnp.bfloat16):
    N, FIN = x.shape
    H = p['w1'].shape[1]
    B = maskT.shape[1]
    C = p['l2w'].shape[1]
    f32 = jnp.float32

    # ---- host-side parameter preprocessing -----------------------------------
    inv = p['bng'] * jax.lax.rsqrt(p['bnv'] + 1e-5)          # fold eval-mode BN
    gw1f = p['gw1'] * inv
    gb1f = (p['gb1'] - p['bnm']) * inv + p['bnb']
    gw2t = p['gw2'].T                                        # [1, 2H]
    l3wn, l3wg = p['l3w'][:H], p['l3w'][H:]                  # split cat weights
    l1wn, l1wh = p['l1w'][:H], p['l1w'][H:]
    l2w_pad = jnp.zeros((H, _PAD_C), f32).at[:, :C].set(p['l2w'])
    l2b_pad = jnp.full((1, _PAD_C), -1e30, f32).at[:, :C].set(p['l2b'])

    # X @ W1 hoisted out of the aggregation loop; root rows gathered here.
    xw = jnp.dot(x, p['w1'], preferred_element_type=f32)     # [N, H]
    x_root = x[root]                                         # [B, FIN]

    # bf16 (default) halves the HBM bytes of the N^2 A_hat stream; f32 accum.
    a_lo = a_hat.astype(agg_dtype)
    xw_lo = xw.astype(agg_dtype)

    # ---- kernel 1: tiled, pipelined GCN aggregation ---------------------------
    tm = _pick_tile(N)
    tk = _pick_tile(N)
    assert N % tm == 0 and N % tk == 0
    ksteps = N // tk
    a_spec_kwargs = {}
    if ksteps >= 3:
        # deeper pipeline on the bandwidth-bound A stream
        a_spec_kwargs = dict(pipeline_mode=pl.Buffered(3))
    a_spec = pl.BlockSpec((tm, tk), lambda i, k: (i, k), **a_spec_kwargs)

    h = pl.pallas_call(
        gcn_kernel,
        out_shape=jax.ShapeDtypeStruct((N, H), f32),
        grid_spec=pltpu.PrefetchScalarGridSpec(
            num_scalar_prefetch=0,
            grid=(N // tm, ksteps),
            in_specs=[pl.BlockSpec((tk, H), lambda i, k: (k, 0)),
                      a_spec,
                      pl.BlockSpec((1, H), lambda i, k: (0, 0))],
            out_specs=pl.BlockSpec((tm, H), lambda i, k: (i, 0)),
            scratch_shapes=[pltpu.VMEM((tm, H), f32)]),
        compiler_params=pltpu.CompilerParams(
            dimension_semantics=("parallel", "arbitrary"),
            vmem_limit_bytes=_VMEM_LIMIT),
        cost_estimate=pl.CostEstimate(
            flops=2 * N * N * H,
            transcendentals=0,
            bytes_accessed=(a_lo.dtype.itemsize * N * N
                            + xw_lo.dtype.itemsize * (N // tm) * N * H
                            + 4 * (N * H + H))),
    )(xw_lo, a_lo, p['b1'])

    # ---- kernel 2: streamed head (tiled over N, accumulators in VMEM) --------
    tn = _pick_tile(N)
    assert N % tn == 0
    nsteps = N // tn
    head_in_specs = [
        pl.BlockSpec((tn, H), lambda i: (i, 0)),        # h        (streamed)
        pl.BlockSpec((tn, B), lambda i: (i, 0)),        # maskT    (streamed)
        pl.BlockSpec((B, FIN), lambda i: (0, 0)),       # x[root]
        pl.BlockSpec((H, 2 * H), lambda i: (0, 0)),     # gw1f (BN folded)
        pl.BlockSpec((1, 2 * H), lambda i: (0, 0)),     # gb1f
        pl.BlockSpec((1, 2 * H), lambda i: (0, 0)),     # gw2^T
        pl.BlockSpec((H, H), lambda i: (0, 0)),         # nw1
        pl.BlockSpec((1, H), lambda i: (0, 0)),         # nb1
        pl.BlockSpec((H, H), lambda i: (0, 0)),         # nw2
        pl.BlockSpec((1, H), lambda i: (0, 0)),         # nb2
        pl.BlockSpec((H, H), lambda i: (0, 0)),         # l3w (h_node half)
        pl.BlockSpec((H, H), lambda i: (0, 0)),         # l3w (h_graph half)
        pl.BlockSpec((1, H), lambda i: (0, 0)),         # l3b
        pl.BlockSpec((FIN, H), lambda i: (0, 0)),       # l0w
        pl.BlockSpec((1, H), lambda i: (0, 0)),         # l0b
        pl.BlockSpec((H, H), lambda i: (0, 0)),         # l1w (news half)
        pl.BlockSpec((H, H), lambda i: (0, 0)),         # l1w (h half)
        pl.BlockSpec((1, H), lambda i: (0, 0)),         # l1b
        pl.BlockSpec((H, _PAD_C), lambda i: (0, 0)),    # l2w (lane-padded)
        pl.BlockSpec((1, _PAD_C), lambda i: (0, 0)),    # l2b (lane-padded)
    ]
    out_pad = pl.pallas_call(
        head_kernel,
        out_shape=jax.ShapeDtypeStruct((B, _PAD_C), f32),
        grid_spec=pltpu.PrefetchScalarGridSpec(
            num_scalar_prefetch=0,
            grid=(nsteps,),
            in_specs=head_in_specs,
            out_specs=pl.BlockSpec((B, _PAD_C), lambda i: (0, 0)),
            scratch_shapes=[pltpu.VMEM((B, H), f32),    # running masked max
                            pltpu.VMEM((1, B), f32),    # online softmax max
                            pltpu.VMEM((1, B), f32),    # online softmax sum
                            pltpu.VMEM((H, B), f32)]),  # weighted sum (lane-major)
        compiler_params=pltpu.CompilerParams(
            dimension_semantics=("arbitrary",),
            vmem_limit_bytes=_VMEM_LIMIT),
        cost_estimate=pl.CostEstimate(
            flops=2 * N * H * (4 * H + B) + 4 * N * (H + B)
                  + 2 * B * (4 * H * H + FIN * H + H * _PAD_C),
            transcendentals=2 * N * B + B * _PAD_C,
            bytes_accessed=4 * (N * (H + B) + 8 * H * H + H * _PAD_C
                                + B * (_PAD_C + FIN + H))),
    )(h, maskT, x_root,
      gw1f, gb1f, gw2t, p['nw1'], p['nb1'], p['nw2'], p['nb2'],
      l3wn, l3wg, p['l3b'],
      p['l0w'], p['l0b'],
      l1wn, l1wh, p['l1b'],
      l2w_pad, l2b_pad)
    return out_pad[:, :C]


# -----------------------------------------------------------------------------
# Pure-JAX reference (mirrors the PyTorch forward), for validation
# -----------------------------------------------------------------------------
def net_reference(x, a, maskT, root, p, agg_dtype=jnp.float32):
    NEG = -1e30
    xw = jnp.dot(x, p['w1'], preferred_element_type=jnp.float32)
    h = jnp.maximum(
        jnp.dot(a.astype(agg_dtype), xw.astype(agg_dtype),
                preferred_element_type=jnp.float32) + p['b1'], 0.0)
    B = maskT.shape[1]
    h_node = jnp.stack(
        [jnp.max(jnp.where(maskT[:, b:b + 1] > 0.5, h, NEG), axis=0)
         for b in range(B)], axis=0)

    g = h @ p['gw1'] + p['gb1']
    g = (g - p['bnm']) * jax.lax.rsqrt(p['bnv'] + 1e-5) * p['bng'] + p['bnb']
    g = jnp.maximum(g, 0.0)
    gate = g @ p['gw2'] + p['gb2']
    nnh = jnp.maximum(h @ p['nw1'] + p['nb1'], 0.0) @ p['nw2'] + p['nb2']

    gate_nb = jnp.where(maskT > 0.5, gate, NEG)
    m = jnp.max(gate_nb, axis=0, keepdims=True)
    e = jnp.where(maskT > 0.5, jnp.exp(gate - m), 0.0)
    alpha = e / jnp.sum(e, axis=0, keepdims=True)
    h_graph = jnp.einsum('nb,nh->bh', alpha, nnh)

    hh = jnp.concatenate([h_node, h_graph], axis=1) @ p['l3w'] + p['l3b']
    news = jnp.maximum(x[root] @ p['l0w'] + p['l0b'], 0.0)
    hh = jnp.maximum(jnp.concatenate([news, hh], axis=1) @ p['l1w'] + p['l1b'], 0.0)
    logits = hh @ p['l2w'] + p['l2b']
    return jax.nn.log_softmax(logits, axis=-1)


# -----------------------------------------------------------------------------
# Deterministic example construction
# -----------------------------------------------------------------------------
def _make_example(N, B, FIN, key):
    nodes_per_graph = N // B
    k0, = jax.random.split(key, 1)
    x = jax.random.normal(k0, (N, FIN), dtype=jnp.float32)
    batch = jnp.repeat(jnp.arange(B), nodes_per_graph)                     # [N]

    # edge_index: star graph inside each graph (root = first node), undirected.
    src, dst = [], []
    for g in range(B):
        o = g * nodes_per_graph
        for j in range(1, nodes_per_graph):
            src += [o, o + j]
            dst += [o + j, o]
    src = jnp.array(src, dtype=jnp.int32)
    dst = jnp.array(dst, dtype=jnp.int32)

    # Dense GCN-normalized adjacency: A_hat = D^{-1/2} (A + I) D^{-1/2}.
    A = jnp.zeros((N, N), dtype=jnp.float32).at[src, dst].set(1.0)
    A = A + jnp.eye(N, dtype=jnp.float32)
    deg = jnp.sum(A, axis=1)
    dinv = 1.0 / jnp.sqrt(deg)
    a_hat = A * dinv[:, None] * dinv[None, :]

    maskT = (batch[:, None] == jnp.arange(B)[None, :]).astype(jnp.float32)  # [N, B]
    diffs = batch[1:] - batch[:-1]
    root = jnp.concatenate(
        [jnp.zeros((1,), jnp.int32),
         (jnp.nonzero(diffs, size=B - 1)[0] + 1).astype(jnp.int32)])        # [B]
    return x, a_hat, maskT, root


def _make_params(fin, h, c, key):
    ks = jax.random.split(key, 22)

    def w(k, shape):
        return (0.1 * jax.random.normal(k, shape)).astype(jnp.float32)

    return {
        'w1':  w(ks[0], (fin, h)),       'b1':  w(ks[1], (1, h)),
        # gate_nn: Lin(H, 2H) -> BN1d(2H, eval) -> ReLU -> Lin(2H, 1)
        'gw1': w(ks[2], (h, 2 * h)),     'gb1': w(ks[3], (1, 2 * h)),
        'bng': (1.0 + 0.1 * jax.random.normal(ks[4], (1, 2 * h))).astype(jnp.float32),
        'bnb': w(ks[5], (1, 2 * h)),
        'bnm': w(ks[6], (1, 2 * h)),
        'bnv': (0.5 + jax.random.uniform(ks[7], (1, 2 * h))).astype(jnp.float32),
        'gw2': w(ks[8], (2 * h, 1)),     'gb2': w(ks[9], (1, 1)),
        # nn: Lin(H, H) -> ReLU -> Lin(H, H)
        'nw1': w(ks[10], (h, h)),        'nb1': w(ks[11], (1, h)),
        'nw2': w(ks[12], (h, h)),        'nb2': w(ks[13], (1, h)),
        # lin3: (2H -> H), lin0: (FIN -> H), lin1: (2H -> H), lin2: (H -> C)
        'l3w': w(ks[14], (2 * h, h)),    'l3b': w(ks[15], (1, h)),
        'l0w': w(ks[16], (fin, h)),      'l0b': w(ks[17], (1, h)),
        'l1w': w(ks[18], (2 * h, h)),    'l1b': w(ks[19], (1, h)),
        'l2w': w(ks[20], (h, c)),        'l2b': w(ks[21], (1, c)),
    }


if __name__ == "__main__":
    FIN, H, C = 8, 32, 4
    key = jax.random.PRNGKey(0)
    kp, kd1, kd2 = jax.random.split(key, 3)
    params = _make_params(FIN, H, C, kp)

    # --- small batch (2 graphs x 8 nodes): strict f32 check + bf16 path -------
    x, a_hat, maskT, root = _make_example(N=16, B=2, FIN=FIN, key=kd1)

    out32 = jax.block_until_ready(
        net_forward(x, a_hat, maskT, root, params, agg_dtype=jnp.float32))
    ref32 = jax.block_until_ready(
        net_reference(x, a_hat, maskT, root, params, agg_dtype=jnp.float32))
    np.testing.assert_allclose(np.asarray(out32), np.asarray(ref32),
                               rtol=1e-4, atol=1e-4)

    outbf = jax.block_until_ready(
        net_forward(x, a_hat, maskT, root, params, agg_dtype=jnp.bfloat16))
    refbf = jax.block_until_ready(
        net_reference(x, a_hat, maskT, root, params, agg_dtype=jnp.bfloat16))
    np.testing.assert_allclose(np.asarray(outbf), np.asarray(refbf),
                               rtol=1e-4, atol=1e-4)

    # --- larger batch (4 graphs x 512 nodes): exercises the 512-tile grid,
    #     multi-buffered bf16 A_hat stream and the streaming head accumulators.
    xL, a_hatL, maskTL, rootL = _make_example(N=2048, B=4, FIN=FIN, key=kd2)
    outL = jax.block_until_ready(
        net_forward(xL, a_hatL, maskTL, rootL, params, agg_dtype=jnp.bfloat16))
    refL = jax.block_until_ready(
        net_reference(xL, a_hatL, maskTL, rootL, params, agg_dtype=jnp.bfloat16))
    np.testing.assert_allclose(np.asarray(outL), np.asarray(refL),
                               rtol=2e-4, atol=2e-4)

    print("KERNEL_OK")
</pallas_src>

<mosaic_0001>
module attributes {stable_mosaic.version = 11 : i64} {
  func.func @gcn_kernel(%arg0: i32, %arg1: i32, %arg2: memref<16x32xf32, #tpu.memory_space<vmem>>, %arg3: memref<16x16xf32, #tpu.memory_space<vmem>>, %arg4: memref<1x32xf32, #tpu.memory_space<vmem>>, %arg5: memref<16x32xf32, #tpu.memory_space<vmem>>, %arg6: memref<16x32xf32, #tpu.memory_space<vmem>>) attributes {dimension_semantics = [#tpu.dimension_semantics<parallel>, #tpu.dimension_semantics<arbitrary>], iteration_bounds = array<i64: 1, 1>, scalar_prefetch = 0 : i64, scratch_operands = 1 : i64, tpu.core_type = #tpu.core_type<tc>, window_params = [{transform_indices = @transform_0, window_bounds = array<i64: 16, 32>}, {transform_indices = @transform_1, window_bounds = array<i64: 16, 16>}, {pipeline_mode = #tpu.pipeline_mode<synchronous>, transform_indices = @transform_2, window_bounds = array<i64: 1, 32>}, {transform_indices = @transform_3, window_bounds = array<i64: 16, 32>}]} {
    %c0_i32 = arith.constant 0 : i32
    %0 = arith.cmpi eq, %arg1, %c0_i32 : i32
    %1 = arith.extui %0 : i1 to i32
    %c0_i32_0 = arith.constant 0 : i32
    %2 = arith.cmpi ne, %1, %c0_i32_0 : i32
    scf.if %2 {
      %cst_10 = arith.constant 0.000000e+00 : f32
      %12 = vector.broadcast %cst_10 : f32 to vector<16x32xf32>
      %c0_11 = arith.constant 0 : index
      %c0_12 = arith.constant 0 : index
      %13 = vector.load %arg6[%c0_11, %c0_12] : memref<16x32xf32, #tpu.memory_space<vmem>>, vector<16x32xf32>
      tpu.vector_store %arg6[%c0_11, %c0_12], %12 {strides = array<i32>} : memref<16x32xf32, #tpu.memory_space<vmem>>, vector<16x32xf32>,
    } else {
    }
    %c0 = arith.constant 0 : index
    %c0_1 = arith.constant 0 : index
    %3 = vector.load %arg6[%c0, %c0_1] : memref<16x32xf32, #tpu.memory_space<vmem>>, vector<16x32xf32>
    %c0_2 = arith.constant 0 : index
    %c0_3 = arith.constant 0 : index
    %4 = vector.load %arg3[%c0_2, %c0_3] : memref<16x16xf32, #tpu.memory_space<vmem>>, vector<16x16xf32>
    %c0_4 = arith.constant 0 : index
    %c0_5 = arith.constant 0 : index
    %5 = vector.load %arg2[%c0_4, %c0_5] : memref<16x32xf32, #tpu.memory_space<vmem>>, vector<16x32xf32>
    %cst = arith.constant dense<0.000000e+00> : vector<16x32xf32>
    %6 = tpu.matmul %4, %5, %cst {dimension_numbers = #tpu.dot_dimension_numbers<[1], [0], [0], [1], [0, 0, 1, 1], [], []>} : vector<16x16xf32>, vector<16x32xf32>, vector<16x32xf32> -> vector<16x32xf32>
    %7 = arith.addf %3, %6 : vector<16x32xf32>
    %c0_6 = arith.constant 0 : index
    %c0_7 = arith.constant 0 : index
    %8 = vector.load %arg6[%c0_6, %c0_7] : memref<16x32xf32, #tpu.memory_space<vmem>>, vector<16x32xf32>
    tpu.vector_store %arg6[%c0_6, %c0_7], %7 {strides = array<i32>} : memref<16x32xf32, #tpu.memory_space<vmem>>, vector<16x32xf32>,
    %c0_i32_8 = arith.constant 0 : i32
    %9 = arith.cmpi eq, %arg1, %c0_i32_8 : i32
    %10 = arith.extui %9 : i1 to i32
    %c0_i32_9 = arith.constant 0 : i32
    %11 = arith.cmpi ne, %10, %c0_i32_9 : i32
    scf.if %11 {
      %c0_10 = arith.constant 0 : index
      %c0_11 = arith.constant 0 : index
      %12 = vector.load %arg6[%c0_10, %c0_11] : memref<16x32xf32, #tpu.memory_space<vmem>>, vector<16x32xf32>
      %c0_12 = arith.constant 0 : index
      %c0_13 = arith.constant 0 : index
      %13 = vector.load %arg4[%c0_12, %c0_13] : memref<1x32xf32, #tpu.memory_space<vmem>>, vector<1x32xf32>
      %14 = vector.broadcast %13 : vector<1x32xf32> to vector<16x32xf32>
      %15 = arith.addf %12, %14 : vector<16x32xf32>
      %cst_14 = arith.constant 0.000000e+00 : f32
      %16 = vector.broadcast %cst_14 : f32 to vector<16x32xf32>
      %17 = arith.maximumf %15, %16 : vector<16x32xf32>
      %c0_15 = arith.constant 0 : index
      %c0_16 = arith.constant 0 : index
      %18 = vector.load %arg5[%c0_15, %c0_16] : memref<16x32xf32, #tpu.memory_space<vmem>>, vector<16x32xf32>
      tpu.vector_store %arg5[%c0_15, %c0_16], %17 {strides = array<i32>} : memref<16x32xf32, #tpu.memory_space<vmem>>, vector<16x32xf32>,
    } else {
    }
    return
  }
  func.func @transform_0(%arg0: i32, %arg1: i32) -> (i32, i32) {
    %c0_i32 = arith.constant 0 : i32
    %c0_i32_0 = arith.constant 0 : i32
    return %arg1, %c0_i32 : i32, i32
  }
  func.func @transform_1(%arg0: i32, %arg1: i32) -> (i32, i32) {
    %c0_i32 = arith.constant 0 : i32
    return %arg0, %arg1 : i32, i32
  }
  func.func @transform_2(%arg0: i32, %arg1: i32) -> (i32, i32) {
    %c0_i32 = arith.constant 0 : i32
    %c0_i32_0 = arith.constant 0 : i32
    %c0_i32_1 = arith.constant 0 : i32
    return %c0_i32, %c0_i32_0 : i32, i32
  }
  func.func @transform_3(%arg0: i32, %arg1: i32) -> (i32, i32) {
    %c0_i32 = arith.constant 0 : i32
    %c0_i32_0 = arith.constant 0 : i32
    return %arg0, %c0_i32 : i32, i32
  }
}

</mosaic_0001>

<llo_original>
// kernel: tpu_custom_call.1
$region0: #{tpu_custom_call.1}
  #allocation0 [shape = 'u32[]', space=smem, size = 0x4, offset = 0x4, fixed_abs, tag = 'smem constant byte address 0x4 - core index']
  #allocation1 [shape = 'u32[72,128]{1,0:T(1,128)}', space=vmem, size = 0x9000, scoped, tag = 'internal scratch']
  #allocation2 [shape = 'f32[16,32]{1,0:T(8,128)}', space=vmem, size = 0x2000, scoped, tag = 'scratch operand']
  %s0 = inlined_call_operand.hbm [shape: f32[16,32], index: 0, kind: input, shape index: {}]
  %s1 = inlined_call_operand.hbm [shape: f32[16,16], index: 1, kind: input, shape index: {}]
  %s2 = inlined_call_operand.vmem [shape: f32[1,32], index: 2, kind: input, shape index: {}]
  %s3 = inlined_call_operand.hbm [shape: f32[16,32], index: 3, kind: output, shape index: {}]
  %s4 = sld [smem:[#allocation0]]
  $region38: #{tpu_custom_call.1} parent=0
    _
  %s6 = ssub.s32 1, %s4
  %s7 = scalar_select 0, %s6, %s4
  $region1: #{tpu_custom_call.1} parent=0
    #allocation3 [shape = 'u8[8192]{0}', space=vmem, size = 0x2000, scoped, tag = 'input window, operand 0, single buffered']
    #allocation4 [shape = 's32[1]{0}', space=sflag, size = 0x4, scoped, tag = 'scoped memory for tpu_custom_call.1']
    #allocation5 [shape = 's32[1]{0}', space=sflag, size = 0x4, scoped, tag = 'scoped memory for tpu_custom_call.1']
    #allocation6 [shape = 'u8[8192]{0}', space=vmem, size = 0x2000, scoped, tag = 'input window, operand 1, single buffered']
    #allocation7 [shape = 's32[1]{0}', space=sflag, size = 0x4, scoped, tag = 'scoped memory for tpu_custom_call.1']
    #allocation8 [shape = 'u8[8192]{0}', space=vmem, size = 0x2000, scoped, tag = 'output window, operand 0, single buffered']
    %8 = vsyncpa [#allocation4], 0
    %9 = vsyncpa [#allocation7], 0
    %10 = vsyncpa [#allocation5], 0
    // Predicated region
    $region2: #{tpu_custom_call.1} parent=1 // pred_check
      _
    $region3: #{tpu_custom_call.1} parent=1 // pred_check_branch
      %12 = sbr.rel (0) target = $region5
    $region4: #{tpu_custom_call.1} parent=1 // pred_region
      %14 = vsyncadd [#allocation4], 0
      %s15 = sshll.u32 %s0, 4
      %s16 = int_to_ptr.hbm [resolvable:$true] %s15
      %s17 = sshll.u32 [#allocation3], 4
      %s18 = int_to_ptr.vmem [resolvable:$true] %s17
      %23 = dma.hbm_to_vmem [thread:$0]  %s16, 256, %s18, [#allocation4], 128, 128, 8
    $region5: #{tpu_custom_call.1} parent=1 // pred_fallthru
      _
    // Predicated region
    $region6: #{tpu_custom_call.1} parent=1 // pred_check
      _
    $region7: #{tpu_custom_call.1} parent=1 // pred_check_branch
      %25 = sbr.rel (0) target = $region9
    $region8: #{tpu_custom_call.1} parent=1 // pred_region
      %27 = vsyncadd [#allocation7], 0
      %s28 = sshll.u32 %s1, 4
      %s29 = int_to_ptr.hbm [resolvable:$true] %s28
      %s30 = sshll.u32 [#allocation6], 4
      %s31 = int_to_ptr.vmem [resolvable:$true] %s30
      %36 = dma.hbm_to_vmem [thread:$0]  %s29, 256, %s31, [#allocation7], 128, 128, 8
    $region9: #{tpu_custom_call.1} parent=1 // pred_fallthru
      _
    // Predicated region
    $region10: #{tpu_custom_call.1} parent=1 // pred_check
      _
    $region11: #{tpu_custom_call.1} parent=1 // pred_check_branch
      %38 = sbr.rel (0) target = $region13
    $region12: #{tpu_custom_call.1} parent=1 // pred_region
      _
    $region13: #{tpu_custom_call.1} parent=1 // pred_fallthru
      _
    // Predicated region
    $region14: #{tpu_custom_call.1} parent=1 // pred_check
      _
    $region15: #{tpu_custom_call.1} parent=1 // pred_check_branch
      %40 = sbr.rel (0) target = $region17
    $region16: #{tpu_custom_call.1} parent=1 // pred_region
      %42 = dma.done [#allocation4], 256
    $region17: #{tpu_custom_call.1} parent=1 // pred_fallthru
      _
    // Predicated region
    $region18: #{tpu_custom_call.1} parent=1 // pred_check
      _
    $region19: #{tpu_custom_call.1} parent=1 // pred_check_branch
      %44 = sbr.rel (0) target = $region21
    $region20: #{tpu_custom_call.1} parent=1 // pred_region
      %46 = dma.done [#allocation7], 256
    $region21: #{tpu_custom_call.1} parent=1 // pred_fallthru
      _
    %p47 = scmp.eq.s32.totalorder 0, 0
    // Predicated region
    $region22: #{tpu_custom_call.1} parent=1 // pred_check
      %p48 = pneg %p47
    $region23: #{tpu_custom_call.1} parent=1 // pred_check_branch
      %50 = sbr.rel (%p48) target = $region25
    $region24: #{tpu_custom_call.1} parent=1 // pred_region
      %vm51 = vcmask 261120
      %52 = vst.msk [vmem:[#allocation2] sm:$0xff] %vm51, 0.0
      %53 = vst.msk [vmem:[#allocation2 + $0x8] sm:$0xff] %vm51, 0.0
    $region25: #{tpu_custom_call.1} parent=1 // pred_fallthru
      _
    %v54 = vld [vmem:[#allocation2] sm:$0xff]
    %v55 = vld [vmem:[#allocation2 + $0x8] sm:$0xff]
    %v56 = vld [vmem:[#allocation6] sm:$0xff]
    %v57 = vld [vmem:[#allocation6 + $0x8] sm:$0xff]
    %v58 = vld [vmem:[#allocation3] sm:$0xff]
    %v59 = vld [vmem:[#allocation3 + $0x8] sm:$0xff]
    %vm60 = vcmask 130048
    %v62 = vsel %vm60, %v56, 0
    %v65 = vsel %vm60, %v57, 0
    %67 = vmatpush.msra.mxu0 0.0
    %68 = vmatpush.msra.mxu0 0.0
    %69 = vmatpush.msra.mxu0 0.0
    %70 = vmatpush.msra.mxu0 0.0
    %71 = vmatpush.msra.mxu0 0.0
    %72 = vmatpush.msra.mxu0 0.0
    %73 = vmatpush.msra.mxu0 0.0
    %74 = vmatpush.msra.mxu0 0.0
    %75 = vmatpush.msra.mxu0 0.0
    %76 = vmatpush.msra.mxu0 0.0
    %77 = vmatpush.msra.mxu0 0.0
    %78 = vmatpush.msra.mxu0 0.0
    %79 = vmatpush.msra.mxu0 0.0
    %80 = vmatpush.msra.mxu0 0.0
    %81 = vmatpush.msra.mxu0 %v59
    %82 = vmatpush.msra.mxu0 %v58
    %83 = vmatmul.f32.gmra.mxu0 %v62
    %v84 = vpop.f32.mrf.mxu0
    %v85 = vadd.f32 0.0, %v84
    %86 = vmatmul.f32.gmra.mxu0 %v65
    %v87 = vpop.f32.mrf.mxu0
    %v88 = vadd.f32 0.0, %v87
    %89 = vdwg.mxu0
    %v90 = vadd.f32 %v54, %v85
    %v91 = vadd.f32 %v55, %v88
    %vm92 = vcmask 261120
    %93 = vst.msk [vmem:[#allocation2] sm:$0xff] %vm92, %v90
    %94 = vst.msk [vmem:[#allocation2 + $0x8] sm:$0xff] %vm92, %v91
    // Predicated region
    $region26: #{tpu_custom_call.1} parent=1 // pred_check
      %p95 = pneg %p47
    $region27: #{tpu_custom_call.1} parent=1 // pred_check_branch
      %97 = sbr.rel (%p95) target = $region29
    $region28: #{tpu_custom_call.1} parent=1 // pred_region
      %v98 = vld [vmem:[#allocation2] sm:$0xff]
      %v99 = vld [vmem:[#allocation2 + $0x8] sm:$0xff]
      %v100 = vld [vmem:[%s2] sm:$0x1]
      %v102 = vperm.slane %v100, 0
      %v104 = vadd.f32 %v98, %v102
      %v105 = vadd.f32 %v99, %v102
      %v106 = vmax.f32 %v104, 0.0
      %v107 = vmax.f32 %v105, 0.0
      %108 = vst.msk [vmem:[#allocation8] sm:$0xff] %vm92, %v106
      %109 = vst.msk [vmem:[#allocation8 + $0x8] sm:$0xff] %vm92, %v107
    $region29: #{tpu_custom_call.1} parent=1 // pred_fallthru
      _
    // Predicated region
    $region30: #{tpu_custom_call.1} parent=1 // pred_check
      _
    $region31: #{tpu_custom_call.1} parent=1 // pred_check_branch
      %111 = sbr.rel (0) target = $region33
    $region32: #{tpu_custom_call.1} parent=1 // pred_region
      %113 = vsyncadd [#allocation5], 0
      %s114 = sshll.u32 [#allocation8], 4
      %s115 = int_to_ptr.vmem [resolvable:$true] %s114
      %s116 = sshll.u32 %s3, 4
      %s117 = int_to_ptr.hbm [resolvable:$true] %s116
      %122 = dma.vmem_to_hbm [thread:$0]  %s115, 256, %s117, [#allocation5], 128, 128, 8
    $region33: #{tpu_custom_call.1} parent=1 // pred_fallthru
      _
    // Predicated region
    $region34: #{tpu_custom_call.1} parent=1 // pred_check
      _
    $region35: #{tpu_custom_call.1} parent=1 // pred_check_branch
      %124 = sbr.rel (0) target = $region37
    $region36: #{tpu_custom_call.1} parent=1 // pred_region
      %126 = dma.done [#allocation5], 256
    $region37: #{tpu_custom_call.1} parent=1 // pred_fallthru
      _
    %127 = vsyncpa [#allocation4], 1
    %128 = vsyncpa [#allocation7], 1
    %129 = vsyncpa [#allocation5], 1

</llo_original>
